<compile_context>
chip_gen: v6e
topology: v6e:2x2x1
jax: 0.10.0
libtpu: 0.0.40
codegen_flags: <defaults>
</compile_context>

<pallas_src>
import jax
import jax.numpy as jnp
from jax.experimental import pallas as pl

# Problem sizes (toy LPRNet stem, same as before).
N, CIN, H, W = 2, 4, 16, 16      # input (NCHW): (2, 4, 16, 16)
C1 = 8                           # channels after the 3x3 conv
C2 = 16                          # channels after the 1x1 conv
K_TAPS = 9 * CIN                 # im2col K per output pixel        (36)
M_ROWS = N * H                   # fused matmul M = batch * rows    (32)
K1 = W * K_TAPS                  # lane-dense K of matmul 1         (576)
N1 = W * C1                      # lane-dense N of matmul 1         (128)
N2 = W * C2                      # lane-dense N of matmul 2         (256)

_FLOPS = 2 * M_ROWS * K1 * N1 + 2 * M_ROWS * N1 * N2
_BYTES = (M_ROWS * K1 * 2 + K1 * N1 * 2 + N1 * 4 +
          N1 * N2 * 2 + N2 * 4 + M_ROWS * N2 * 4)


def lprnet_kernel(p_ref, w1_ref, b1_ref, w2_ref, b2_ref, o_ref):
    """Whole forward pass in one shot (single grid point, whole arrays in VMEM).

    p_ref : (M_ROWS, K1)  bf16  im2col patches, one row per (image, image-row)
    w1_ref: (K1, N1)      bf16  block-diag(3x3 conv * BN scale) over width
    b1_ref: (1, N1)       f32   BN shift, tiled across width
    w2_ref: (N1, N2)      bf16  block-diag(1x1 conv) over width
    b2_ref: (1, N2)       f32   1x1 conv bias, tiled across width
    o_ref : (M_ROWS, N2)  f32   NHWC output with (W, C2) merged onto lanes
    """
    # QuantStub: identity (eager-mode, not converted).
    # Conv3x3 (with BN scale folded in) + BN shift + ReLU.
    y = jnp.dot(p_ref[...], w1_ref[...], preferred_element_type=jnp.float32)
    y = jnp.maximum(y + b1_ref[...], 0.0)
    # Conv1x1 + bias + ReLU.
    z = jnp.dot(y.astype(jnp.bfloat16), w2_ref[...],
                preferred_element_type=jnp.float32)
    z = jnp.maximum(z + b2_ref[...], 0.0)
    # DeQuantStub: identity (eager-mode, not converted).
    o_ref[...] = z


def prepare_params(params):
    """One-time weight prep: fold BN + block-diagonal (Kronecker) expansion."""
    w1, bn_scale, bn_shift, w2, b2 = params
    # Fold BN scale into the 3x3 conv weights; keep the shift as a bias.
    w1_folded = (w1 * bn_scale).reshape(K_TAPS, C1)            # (36, 8)  f32
    # Merge the image width into the matmul N dimension so every load/push/
    # store is lane-dense (>=128 lanes) with no in-kernel reshapes.
    eye_w = jnp.eye(W, dtype=jnp.float32)
    w1_bd = jnp.kron(eye_w, w1_folded).astype(jnp.bfloat16)    # (576, 128)
    w2_bd = jnp.kron(eye_w, w2).astype(jnp.bfloat16)           # (128, 256)
    b1_wide = jnp.tile(bn_shift, W).reshape(1, N1).astype(jnp.float32)
    b2_wide = jnp.tile(b2, W).reshape(1, N2).astype(jnp.float32)
    return w1_bd, b1_wide, w2_bd, b2_wide


@jax.jit
def quantized_lprnet_forward(x_nchw, w1_bd, b1_wide, w2_bd, b2_wide):
    """x_nchw: (N, CIN, H, W) f32  ->  (N, C2, H, W) f32."""
    # Wrapper glue (XLA fuses transpose + pad + concat into one producer):
    # NCHW -> NHWC, zero-pad (pad=1), im2col, merge (W, tap, cin) onto lanes.
    x_nhwc = jnp.transpose(x_nchw, (0, 2, 3, 1))
    x_pad = jnp.pad(x_nhwc, ((0, 0), (1, 1), (1, 1), (0, 0)))
    patches = jnp.concatenate(
        [x_pad[:, dy:dy + H, dx:dx + W, :]
         for dy in range(3) for dx in range(3)], axis=-1)      # (N, H, W, 36)
    patches = patches.reshape(M_ROWS, K1).astype(jnp.bfloat16)  # (32, 576)

    out = pl.pallas_call(
        lprnet_kernel,
        out_shape=jax.ShapeDtypeStruct((M_ROWS, N2), jnp.float32),
        cost_estimate=pl.CostEstimate(
            flops=_FLOPS, transcendentals=0, bytes_accessed=_BYTES),
    )(patches, w1_bd, b1_wide, w2_bd, b2_wide)

    # (N*H, W*C2) -> NHWC -> NCHW (PyTorch output convention).
    return jnp.transpose(out.reshape(N, H, W, C2), (0, 3, 1, 2))


def reference_forward(x_nchw, params, matmul_dtype=jnp.float32):
    """Pure-JAX reference.  matmul_dtype=bf16 mirrors the kernel's MXU casts."""
    w1, bn_scale, bn_shift, w2, b2 = params
    x = jnp.transpose(x_nchw, (0, 2, 3, 1))                    # NHWC
    w1_folded = w1 * bn_scale
    y = jax.lax.conv_general_dilated(
        x.astype(matmul_dtype), w1_folded.astype(matmul_dtype),
        window_strides=(1, 1), padding="SAME",
        dimension_numbers=("NHWC", "HWIO", "NHWC"),
        preferred_element_type=jnp.float32)
    y = jnp.maximum(y + bn_shift, 0.0)
    z = jnp.einsum("nhwc,cd->nhwd", y.astype(matmul_dtype),
                   w2.astype(matmul_dtype),
                   preferred_element_type=jnp.float32) + b2
    z = jnp.maximum(z, 0.0)
    return jnp.transpose(z, (0, 3, 1, 2))                      # NCHW


def init_params(key):
    k1, k2, k3, k4, k5, k6, k7 = jax.random.split(key, 7)
    w1 = jax.random.normal(k1, (3, 3, CIN, C1), jnp.float32) * 0.1   # HWIO
    gamma = 1.0 + 0.1 * jax.random.normal(k2, (C1,), jnp.float32)
    beta = 0.1 * jax.random.normal(k3, (C1,), jnp.float32)
    run_mean = 0.1 * jax.random.normal(k4, (C1,), jnp.float32)
    run_var = jnp.abs(jax.random.normal(k5, (C1,), jnp.float32)) + 0.5
    eps = 1e-5
    bn_scale = gamma / jnp.sqrt(run_var + eps)
    bn_shift = beta - run_mean * bn_scale
    w2 = jax.random.normal(k6, (C1, C2), jnp.float32) * 0.1
    b2 = 0.1 * jax.random.normal(k7, (C2,), jnp.float32)
    return (w1, bn_scale, bn_shift, w2, b2)


if __name__ == "__main__":
    key = jax.random.PRNGKey(0)
    kx, kp = jax.random.split(key)
    x = jax.random.normal(kx, (N, CIN, H, W), jnp.float32)
    params = init_params(kp)
    prepped = prepare_params(params)

    out = jax.block_until_ready(quantized_lprnet_forward(x, *prepped))
    assert out.shape == (N, C2, H, W), out.shape

    # Tight check against a reference using the same bf16 matmul rounding.
    ref_bf16 = jax.block_until_ready(reference_forward(x, params, jnp.bfloat16))
    # Sanity check against the full-f32 reference (bf16-appropriate tolerance).
    ref_f32 = jax.block_until_ready(reference_forward(x, params, jnp.float32))

    assert jnp.allclose(out, ref_bf16, atol=1e-4, rtol=1e-4), \
        float(jnp.max(jnp.abs(out - ref_bf16)))
    assert jnp.allclose(out, ref_f32, atol=5e-2, rtol=5e-2), \
        float(jnp.max(jnp.abs(out - ref_f32)))

    print("KERNEL_OK")
</pallas_src>

<mosaic_0001>
module attributes {stable_mosaic.version = 11 : i64} {
  func.func @lprnet_kernel(%arg0: memref<32x576xbf16, #tpu.memory_space<vmem>>, %arg1: memref<576x128xbf16, #tpu.memory_space<vmem>>, %arg2: memref<1x128xf32, #tpu.memory_space<vmem>>, %arg3: memref<128x256xbf16, #tpu.memory_space<vmem>>, %arg4: memref<1x256xf32, #tpu.memory_space<vmem>>, %arg5: memref<32x256xf32, #tpu.memory_space<vmem>>) attributes {dimension_semantics = [], scalar_prefetch = 0 : i64, scratch_operands = 0 : i64, tpu.core_type = #tpu.core_type<tc>} {
    %c0 = arith.constant 0 : index
    %c0_0 = arith.constant 0 : index
    %0 = vector.load %arg0[%c0, %c0_0] : memref<32x576xbf16, #tpu.memory_space<vmem>>, vector<32x576xbf16>
    %c0_1 = arith.constant 0 : index
    %c0_2 = arith.constant 0 : index
    %1 = vector.load %arg1[%c0_1, %c0_2] : memref<576x128xbf16, #tpu.memory_space<vmem>>, vector<576x128xbf16>
    %cst = arith.constant dense<0.000000e+00> : vector<32x128xf32>
    %2 = tpu.matmul %0, %1, %cst {dimension_numbers = #tpu.dot_dimension_numbers<[1], [0], [0], [1], [0, 0, 1, 1], [], []>} : vector<32x576xbf16>, vector<576x128xbf16>, vector<32x128xf32> -> vector<32x128xf32>
    %c0_3 = arith.constant 0 : index
    %c0_4 = arith.constant 0 : index
    %3 = vector.load %arg2[%c0_3, %c0_4] : memref<1x128xf32, #tpu.memory_space<vmem>>, vector<1x128xf32>
    %4 = vector.broadcast %3 : vector<1x128xf32> to vector<32x128xf32>
    %5 = arith.addf %2, %4 : vector<32x128xf32>
    %cst_5 = arith.constant 0.000000e+00 : f32
    %6 = vector.broadcast %cst_5 : f32 to vector<32x128xf32>
    %7 = arith.maximumf %5, %6 : vector<32x128xf32>
    %8 = arith.truncf %7 : vector<32x128xf32> to vector<32x128xbf16>
    %c0_6 = arith.constant 0 : index
    %c0_7 = arith.constant 0 : index
    %9 = vector.load %arg3[%c0_6, %c0_7] : memref<128x256xbf16, #tpu.memory_space<vmem>>, vector<128x256xbf16>
    %cst_8 = arith.constant dense<0.000000e+00> : vector<32x256xf32>
    %10 = tpu.matmul %8, %9, %cst_8 {dimension_numbers = #tpu.dot_dimension_numbers<[1], [0], [0], [1], [0, 0, 1, 1], [], []>} : vector<32x128xbf16>, vector<128x256xbf16>, vector<32x256xf32> -> vector<32x256xf32>
    %c0_9 = arith.constant 0 : index
    %c0_10 = arith.constant 0 : index
    %11 = vector.load %arg4[%c0_9, %c0_10] : memref<1x256xf32, #tpu.memory_space<vmem>>, vector<1x256xf32>
    %12 = vector.broadcast %11 : vector<1x256xf32> to vector<32x256xf32>
    %13 = arith.addf %10, %12 : vector<32x256xf32>
    %cst_11 = arith.constant 0.000000e+00 : f32
    %14 = vector.broadcast %cst_11 : f32 to vector<32x256xf32>
    %15 = arith.maximumf %13, %14 : vector<32x256xf32>
    %c0_12 = arith.constant 0 : index
    %c0_13 = arith.constant 0 : index
    %16 = vector.load %arg5[%c0_12, %c0_13] : memref<32x256xf32, #tpu.memory_space<vmem>>, vector<32x256xf32>
    tpu.vector_store %arg5[%c0_12, %c0_13], %15 {strides = array<i32>} : memref<32x256xf32, #tpu.memory_space<vmem>>, vector<32x256xf32>,
    return
  }
}

</mosaic_0001>

<llo_original>
// kernel: quantized_lprnet_forward.1
$region0: #{quantized_lprnet_forward.1}
  #allocation0 [shape = 'u32[]', space=smem, size = 0x4, offset = 0x4, fixed_abs, tag = 'smem constant byte address 0x4 - core index']
  #allocation1 [shape = 'u32[144,128]{1,0:T(1,128)}', space=vmem, size = 0x12000, scoped, tag = 'internal scratch']
  %s0 = inlined_call_operand.vmem [shape: bf16[32,576], index: 0, kind: input, shape index: {}]
  %s1 = inlined_call_operand.vmem [shape: bf16[576,128], index: 1, kind: input, shape index: {}]
  %s2 = inlined_call_operand.vmem [shape: f32[1,128], index: 2, kind: input, shape index: {}]
  %s3 = inlined_call_operand.vmem [shape: bf16[128,256], index: 3, kind: input, shape index: {}]
  %s4 = inlined_call_operand.vmem [shape: f32[1,256], index: 4, kind: input, shape index: {}]
  %s5 = inlined_call_operand.vmem [shape: f32[32,256], index: 5, kind: output, shape index: {}]
  %s6 = sld [smem:[#allocation0]]
  $region30: #{quantized_lprnet_forward.1} parent=0
    _
  %s8 = ssub.s32 1, %s6
  %s9 = scalar_select 0, %s8, %s6
  // Predicated region
  $region2: #{quantized_lprnet_forward.1} parent=0 // pred_check
    _
  $region3: #{quantized_lprnet_forward.1} parent=0 // pred_check_branch
    %11 = sbr.rel (0) target = $region5
  $region4: #{quantized_lprnet_forward.1} parent=0 // pred_region
    _
  $region5: #{quantized_lprnet_forward.1} parent=0 // pred_fallthru
    _
  // Predicated region
  $region6: #{quantized_lprnet_forward.1} parent=0 // pred_check
    _
  $region7: #{quantized_lprnet_forward.1} parent=0 // pred_check_branch
    %13 = sbr.rel (0) target = $region9
  $region8: #{quantized_lprnet_forward.1} parent=0 // pred_region
    _
  $region9: #{quantized_lprnet_forward.1} parent=0 // pred_fallthru
    _
  // Predicated region
  $region10: #{quantized_lprnet_forward.1} parent=0 // pred_check
    _
  $region11: #{quantized_lprnet_forward.1} parent=0 // pred_check_branch
    %15 = sbr.rel (0) target = $region13
  $region12: #{quantized_lprnet_forward.1} parent=0 // pred_region
    _
  $region13: #{quantized_lprnet_forward.1} parent=0 // pred_fallthru
    _
  // Predicated region
  $region14: #{quantized_lprnet_forward.1} parent=0 // pred_check
    _
  $region15: #{quantized_lprnet_forward.1} parent=0 // pred_check_branch
    %17 = sbr.rel (0) target = $region17
  $region16: #{quantized_lprnet_forward.1} parent=0 // pred_region
    _
  $region17: #{quantized_lprnet_forward.1} parent=0 // pred_fallthru
    _
  // Predicated region
  $region18: #{quantized_lprnet_forward.1} parent=0 // pred_check
    _
  $region19: #{quantized_lprnet_forward.1} parent=0 // pred_check_branch
    %19 = sbr.rel (0) target = $region21
  $region20: #{quantized_lprnet_forward.1} parent=0 // pred_region
    _
  $region21: #{quantized_lprnet_forward.1} parent=0 // pred_fallthru
    _
  %v21 = vld [vmem:[%s0] sm:$0xff]
  %v22 = vld [vmem:[%s0 + $0x8] sm:$0xff]
  %v23 = vld [vmem:[%s0 + $0x10] sm:$0xf]
  %v24 = vld [vmem:[%s0 + $0x14] sm:$0xff]
  %v25 = vld [vmem:[%s0 + $0x1c] sm:$0xff]
  %v26 = vld [vmem:[%s0 + $0x24] sm:$0xf]
  %v27 = vld [vmem:[%s0 + $0x28] sm:$0xff]
  %v28 = vld [vmem:[%s0 + $0x30] sm:$0xff]
  %v29 = vld [vmem:[%s0 + $0x38] sm:$0xf]
  %v30 = vld [vmem:[%s0 + $0x3c] sm:$0xff]
  %v31 = vld [vmem:[%s0 + $0x44] sm:$0xff]
  %v32 = vld [vmem:[%s0 + $0x4c] sm:$0xf]
  %v33 = vld [vmem:[%s1] sm:$0xf]
  %v34 = vld [vmem:[%s1 + $0x4] sm:$0xf]
  %v35 = vld [vmem:[%s1 + $0x8] sm:$0xf]
  %v36 = vld [vmem:[%s1 + $0xc] sm:$0xf]
  %v37 = vld [vmem:[%s1 + $0x10] sm:$0xf]
  %v38 = vld [vmem:[%s1 + $0x14] sm:$0xf]
  %v39 = vld [vmem:[%s1 + $0x18] sm:$0xf]
  %v40 = vld [vmem:[%s1 + $0x1c] sm:$0xf]
  %v41 = vld [vmem:[%s1 + $0x20] sm:$0xf]
  %v42 = vld [vmem:[%s1 + $0x24] sm:$0xf]
  %v43 = vld [vmem:[%s1 + $0x28] sm:$0xf]
  %v44 = vld [vmem:[%s1 + $0x2c] sm:$0xf]
  %v45 = vld [vmem:[%s1 + $0x30] sm:$0xf]
  %v46 = vld [vmem:[%s1 + $0x34] sm:$0xf]
  %v47 = vld [vmem:[%s1 + $0x38] sm:$0xf]
  %v48 = vld [vmem:[%s1 + $0x3c] sm:$0xf]
  %v49 = vld [vmem:[%s1 + $0x40] sm:$0xf]
  %v50 = vld [vmem:[%s1 + $0x44] sm:$0xf]
  %v51 = vld [vmem:[%s1 + $0x48] sm:$0xf]
  %v52 = vld [vmem:[%s1 + $0x4c] sm:$0xf]
  %v53 = vld [vmem:[%s1 + $0x50] sm:$0xf]
  %v54 = vld [vmem:[%s1 + $0x54] sm:$0xf]
  %v55 = vld [vmem:[%s1 + $0x58] sm:$0xf]
  %v56 = vld [vmem:[%s1 + $0x5c] sm:$0xf]
  %v57 = vld [vmem:[%s1 + $0x60] sm:$0xf]
  %v58 = vld [vmem:[%s1 + $0x64] sm:$0xf]
  %v59 = vld [vmem:[%s1 + $0x68] sm:$0xf]
  %v60 = vld [vmem:[%s1 + $0x6c] sm:$0xf]
  %v61 = vld [vmem:[%s1 + $0x70] sm:$0xf]
  %v62 = vld [vmem:[%s1 + $0x74] sm:$0xf]
  %v63 = vld [vmem:[%s1 + $0x78] sm:$0xf]
  %v64 = vld [vmem:[%s1 + $0x7c] sm:$0xf]
  %v65 = vld [vmem:[%s1 + $0x80] sm:$0xf]
  %v66 = vld [vmem:[%s1 + $0x84] sm:$0xf]
  %v67 = vld [vmem:[%s1 + $0x88] sm:$0xf]
  %v68 = vld [vmem:[%s1 + $0x8c] sm:$0xf]
  %v69 = vld [vmem:[%s1 + $0x90] sm:$0xf]
  %v70 = vld [vmem:[%s1 + $0x94] sm:$0xf]
  %v71 = vld [vmem:[%s1 + $0x98] sm:$0xf]
  %v72 = vld [vmem:[%s1 + $0x9c] sm:$0xf]
  %v73 = vld [vmem:[%s1 + $0xa0] sm:$0xf]
  %v74 = vld [vmem:[%s1 + $0xa4] sm:$0xf]
  %v75 = vld [vmem:[%s1 + $0xa8] sm:$0xf]
  %v76 = vld [vmem:[%s1 + $0xac] sm:$0xf]
  %v77 = vld [vmem:[%s1 + $0xb0] sm:$0xf]
  %v78 = vld [vmem:[%s1 + $0xb4] sm:$0xf]
  %v79 = vld [vmem:[%s1 + $0xb8] sm:$0xf]
  %v80 = vld [vmem:[%s1 + $0xbc] sm:$0xf]
  %v81 = vld [vmem:[%s1 + $0xc0] sm:$0xf]
  %v82 = vld [vmem:[%s1 + $0xc4] sm:$0xf]
  %v83 = vld [vmem:[%s1 + $0xc8] sm:$0xf]
  %v84 = vld [vmem:[%s1 + $0xcc] sm:$0xf]
  %v85 = vld [vmem:[%s1 + $0xd0] sm:$0xf]
  %v86 = vld [vmem:[%s1 + $0xd4] sm:$0xf]
  %v87 = vld [vmem:[%s1 + $0xd8] sm:$0xf]
  %v88 = vld [vmem:[%s1 + $0xdc] sm:$0xf]
  %v89 = vld [vmem:[%s1 + $0xe0] sm:$0xf]
  %v90 = vld [vmem:[%s1 + $0xe4] sm:$0xf]
  %v91 = vld [vmem:[%s1 + $0xe8] sm:$0xf]
  %v92 = vld [vmem:[%s1 + $0xec] sm:$0xf]
  %v93 = vld [vmem:[%s1 + $0xf0] sm:$0xf]
  %v94 = vld [vmem:[%s1 + $0xf4] sm:$0xf]
  %v95 = vld [vmem:[%s1 + $0xf8] sm:$0xf]
  %v96 = vld [vmem:[%s1 + $0xfc] sm:$0xf]
  %v97 = vld [vmem:[%s1 + $0x100] sm:$0xf]
  %v98 = vld [vmem:[%s1 + $0x104] sm:$0xf]
  %v99 = vld [vmem:[%s1 + $0x108] sm:$0xf]
  %v100 = vld [vmem:[%s1 + $0x10c] sm:$0xf]
  %v101 = vld [vmem:[%s1 + $0x110] sm:$0xf]
  %v102 = vld [vmem:[%s1 + $0x114] sm:$0xf]
  %v103 = vld [vmem:[%s1 + $0x118] sm:$0xf]
  %v104 = vld [vmem:[%s1 + $0x11c] sm:$0xf]
  %v105 = vld [vmem:[%s2] sm:$0x1]
  %v107 = vlaneseq
  %v108 = vshrl.u32 %v107, 7
  %v109 = vsub.s32 0, %v108
  %v110 = vrot.slane %v105, %v109
  %v124 = vunpack.c.l.b16 %v21
  %v125 = vunpack.c.h.b16 %v21
  %v126 = vunpack.c.l.b16 %v22
  %v127 = vunpack.c.h.b16 %v22
  %v128 = vunpack.c.l.b16 %v23
  %v129 = vunpack.c.l.b16 %v24
  %v130 = vunpack.c.h.b16 %v24
  %v131 = vunpack.c.l.b16 %v25
  %v132 = vunpack.c.h.b16 %v25
  %v133 = vunpack.c.l.b16 %v26
  %v134 = vunpack.c.l.b16 %v27
  %v135 = vunpack.c.h.b16 %v27
  %v136 = vunpack.c.l.b16 %v28
  %v137 = vunpack.c.h.b16 %v28
  %v138 = vunpack.c.l.b16 %v29
  %v139 = vunpack.c.l.b16 %v30
  %v140 = vunpack.c.h.b16 %v30
  %v141 = vunpack.c.l.b16 %v31
  %v142 = vunpack.c.h.b16 %v31
  %v143 = vunpack.c.l.b16 %v32
  %v144 = vpack.c.b16 %v129, %v124
  %v145 = vpack.c.b16 %v130, %v125
  %v146 = vpack.c.b16 %v131, %v126
  %v147 = vpack.c.b16 %v132, %v127
  %v148 = vpack.c.b16 %v133, %v128
  %v149 = vpack.c.b16 %v139, %v134
  %v150 = vpack.c.b16 %v140, %v135
  %v151 = vpack.c.b16 %v141, %v136
  %v152 = vpack.c.b16 %v142, %v137
  %v153 = vpack.c.b16 %v143, %v138
  %v234 = vunpack.c.l.b16 %v33
  %v235 = vunpack.c.l.b16 %v34
  %v236 = vunpack.c.l.b16 %v35
  %v237 = vunpack.c.l.b16 %v36
  %v238 = vunpack.c.l.b16 %v37
  %v239 = vunpack.c.l.b16 %v38
  %v240 = vunpack.c.l.b16 %v39
  %v241 = vunpack.c.l.b16 %v40
  %v242 = vunpack.c.l.b16 %v41
  %v243 = vunpack.c.l.b16 %v42
  %v244 = vunpack.c.l.b16 %v43
  %v245 = vunpack.c.l.b16 %v44
  %v246 = vunpack.c.l.b16 %v45
  %v247 = vunpack.c.l.b16 %v46
  %v248 = vunpack.c.l.b16 %v47
  %v249 = vunpack.c.l.b16 %v48
  %v250 = vunpack.c.l.b16 %v49
  %v251 = vunpack.c.l.b16 %v50
  %v252 = vunpack.c.l.b16 %v51
  %v253 = vunpack.c.l.b16 %v52
  %v254 = vunpack.c.l.b16 %v53
  %v255 = vunpack.c.l.b16 %v54
  %v256 = vunpack.c.l.b16 %v55
  %v257 = vunpack.c.l.b16 %v56
  %v258 = vunpack.c.l.b16 %v57
  %v259 = vunpack.c.l.b16 %v58
  %v260 = vunpack.c.l.b16 %v59
  %v261 = vunpack.c.l.b16 %v60
  %v262 = vunpack.c.l.b16 %v61
  %v263 = vunpack.c.l.b16 %v62
  %v264 = vunpack.c.l.b16 %v63
  %v265 = vunpack.c.l.b16 %v64
  %v266 = vunpack.c.l.b16 %v65
  %v267 = vunpack.c.l.b16 %v66
  %v268 = vunpack.c.l.b16 %v67
  %v269 = vunpack.c.l.b16 %v68
  %v270 = vunpack.c.l.b16 %v69
  %v271 = vunpack.c.l.b16 %v70
  %v272 = vunpack.c.l.b16 %v71
  %v273 = vunpack.c.l.b16 %v72
  %v274 = vunpack.c.l.b16 %v73
  %v275 = vunpack.c.l.b16 %v74
  %v276 = vunpack.c.l.b16 %v75
  %v277 = vunpack.c.l.b16 %v76
  %v278 = vunpack.c.l.b16 %v77
  %v279 = vunpack.c.l.b16 %v78
  %v280 = vunpack.c.l.b16 %v79
  %v281 = vunpack.c.l.b16 %v80
  %v282 = vunpack.c.l.b16 %v81
  %v283 = vunpack.c.l.b16 %v82
  %v284 = vunpack.c.l.b16 %v83
  %v285 = vunpack.c.l.b16 %v84
  %v286 = vunpack.c.l.b16 %v85
  %v287 = vunpack.c.l.b16 %v86
  %v288 = vunpack.c.l.b16 %v87
  %v289 = vunpack.c.l.b16 %v88
  %v290 = vunpack.c.l.b16 %v89
  %v291 = vunpack.c.l.b16 %v90
  %v292 = vunpack.c.l.b16 %v91
  %v293 = vunpack.c.l.b16 %v92
  %v294 = vunpack.c.l.b16 %v93
  %v295 = vunpack.c.l.b16 %v94
  %v296 = vunpack.c.l.b16 %v95
  %v297 = vunpack.c.l.b16 %v96
  %v298 = vunpack.c.l.b16 %v97
  %v299 = vunpack.c.l.b16 %v98
  %v300 = vunpack.c.l.b16 %v99
  %v301 = vunpack.c.l.b16 %v100
  %v302 = vunpack.c.l.b16 %v101
  %v303 = vunpack.c.l.b16 %v102
  %v304 = vunpack.c.l.b16 %v103
  %v305 = vunpack.c.l.b16 %v104
  %v306 = vpack.c.b16 %v235, %v234
  %v307 = vpack.c.b16 %v237, %v236
  %v308 = vpack.c.b16 %v239, %v238
  %v309 = vpack.c.b16 %v241, %v240
  %v310 = vpack.c.b16 %v243, %v242
  %v311 = vpack.c.b16 %v245, %v244
  %v312 = vpack.c.b16 %v247, %v246
  %v313 = vpack.c.b16 %v249, %v248
  %v314 = vpack.c.b16 %v251, %v250
  %v315 = vpack.c.b16 %v253, %v252
  %v316 = vpack.c.b16 %v255, %v254
  %v317 = vpack.c.b16 %v257, %v256
  %v318 = vpack.c.b16 %v259, %v258
  %v319 = vpack.c.b16 %v261, %v260
  %v320 = vpack.c.b16 %v263, %v262
  %v321 = vpack.c.b16 %v265, %v264
  %v322 = vpack.c.b16 %v267, %v266
  %v323 = vpack.c.b16 %v269, %v268
  %v324 = vpack.c.b16 %v271, %v270
  %v325 = vpack.c.b16 %v273, %v272
  %v326 = vpack.c.b16 %v275, %v274
  %v327 = vpack.c.b16 %v277, %v276
  %v328 = vpack.c.b16 %v279, %v278
  %v329 = vpack.c.b16 %v281, %v280
  %v330 = vpack.c.b16 %v283, %v282
  %v331 = vpack.c.b16 %v285, %v284
  %v332 = vpack.c.b16 %v287, %v286
  %v333 = vpack.c.b16 %v289, %v288
  %v334 = vpack.c.b16 %v291, %v290
  %v335 = vpack.c.b16 %v293, %v292
  %v336 = vpack.c.b16 %v295, %v294
  %v337 = vpack.c.b16 %v297, %v296
  %v338 = vpack.c.b16 %v299, %v298
  %v339 = vpack.c.b16 %v301, %v300
  %v340 = vpack.c.b16 %v303, %v302
  %v341 = vpack.c.b16 %v305, %v304
  %vm378 = vcmask 523264
  %v380 = vsel %vm378, %v148, 0
  %v383 = vsel %vm378, %v153, 0
  %385 = vmatprep.subr.bf16.mxu0 0
  %386 = vmatpush1.bf16.msra.mxu0 %v313
  %387 = vmatprep.subr.bf16.mxu0 0
  %388 = vmatpush1.bf16.msra.mxu0 %v312
  %389 = vmatprep.subr.bf16.mxu0 0
  %390 = vmatpush1.bf16.msra.mxu0 %v311
  %391 = vmatprep.subr.bf16.mxu0 0
  %392 = vmatpush1.bf16.msra.mxu0 %v310
  %393 = vmatprep.subr.bf16.mxu0 0
  %394 = vmatpush1.bf16.msra.mxu0 %v309
  %395 = vmatprep.subr.bf16.mxu0 0
  %396 = vmatpush1.bf16.msra.mxu0 %v308
  %397 = vmatprep.subr.bf16.mxu0 0
  %398 = vmatpush1.bf16.msra.mxu0 %v307
  %399 = vmatprep.subr.bf16.mxu0 0
  %400 = vmatpush1.bf16.msra.mxu0 %v306
  %401 = vmatprep.subr.bf16.mxu0 0
  %402 = vmatpush2.bf16.msra.mxu0 %v321
  %403 = vmatprep.subr.bf16.mxu0 0
  %404 = vmatpush2.bf16.msra.mxu0 %v320
  %405 = vmatprep.subr.bf16.mxu0 0
  %406 = vmatpush2.bf16.msra.mxu0 %v319
  %407 = vmatprep.subr.bf16.mxu0 0
  %408 = vmatpush2.bf16.msra.mxu0 %v318
  %409 = vmatprep.subr.bf16.mxu0 0
  %410 = vmatpush2.bf16.msra.mxu0 %v317
  %411 = vmatprep.subr.bf16.mxu0 0
  %412 = vmatpush2.bf16.msra.mxu0 %v316
  %413 = vmatprep.subr.bf16.mxu0 0
  %414 = vmatpush2.bf16.msra.mxu0 %v315
  %415 = vmatprep.subr.bf16.mxu0 0
  %416 = vmatpush2.bf16.msra.mxu0 %v314
  %417 = vmatprep.mubr.bf16.mxu0 %v145
  %418 = vmatmul.mubr.bf16.gmra.mxu0 %v144
  %v419 = vpop.f32.mrf.mxu0
  %v420 = vadd.f32 %v110, %v419
  %v421 = vpop.f32.mrf.mxu0
  %v422 = vpop.f32.mrf.mxu0
  %v423 = vadd.f32 %v110, %v422
  %v424 = vpop.f32.mrf.mxu0
  %425 = vmatprep.mubr.bf16.mxu0 %v150
  %426 = vmatmul.mubr.bf16.gmra.mxu0 %v149
  %v427 = vpop.f32.mrf.mxu0
  %v428 = vadd.f32 %v110, %v427
  %v429 = vpop.f32.mrf.mxu0
  %v430 = vpop.f32.mrf.mxu0
  %v431 = vadd.f32 %v110, %v430
  %v432 = vpop.f32.mrf.mxu0
  %433 = vdwg.mxu0
  %434 = vmatprep.subr.bf16.mxu0 0
  %435 = vmatpush1.bf16.msra.mxu0 %v329
  %436 = vmatprep.subr.bf16.mxu0 0
  %437 = vmatpush1.bf16.msra.mxu0 %v328
  %438 = vmatprep.subr.bf16.mxu0 0
  %439 = vmatpush1.bf16.msra.mxu0 %v327
  %440 = vmatprep.subr.bf16.mxu0 0
  %441 = vmatpush1.bf16.msra.mxu0 %v326
  %442 = vmatprep.subr.bf16.mxu0 0
  %443 = vmatpush1.bf16.msra.mxu0 %v325
  %444 = vmatprep.subr.bf16.mxu0 0
  %445 = vmatpush1.bf16.msra.mxu0 %v324
  %446 = vmatprep.subr.bf16.mxu0 0
  %447 = vmatpush1.bf16.msra.mxu0 %v323
  %448 = vmatprep.subr.bf16.mxu0 0
  %449 = vmatpush1.bf16.msra.mxu0 %v322
  %450 = vmatprep.subr.bf16.mxu0 0
  %451 = vmatpush2.bf16.msra.mxu0 %v337
  %452 = vmatprep.subr.bf16.mxu0 0
  %453 = vmatpush2.bf16.msra.mxu0 %v336
  %454 = vmatprep.subr.bf16.mxu0 0
  %455 = vmatpush2.bf16.msra.mxu0 %v335
  %456 = vmatprep.subr.bf16.mxu0 0
  %457 = vmatpush2.bf16.msra.mxu0 %v334
  %458 = vmatprep.subr.bf16.mxu0 0
  %459 = vmatpush2.bf16.msra.mxu0 %v333
  %460 = vmatprep.subr.bf16.mxu0 0
  %461 = vmatpush2.bf16.msra.mxu0 %v332
  %462 = vmatprep.subr.bf16.mxu0 0
  %463 = vmatpush2.bf16.msra.mxu0 %v331
  %464 = vmatprep.subr.bf16.mxu0 0
  %465 = vmatpush2.bf16.msra.mxu0 %v330
  %466 = vmatprep.mubr.bf16.mxu0 %v147
  %467 = vmatmul.mubr.bf16.gmra.mxu0 %v146
  %v468 = vpop.f32.mrf.mxu0
  %v469 = vadd.f32 %v420, %v468
  %v470 = vpop.f32.mrf.mxu0
  %v471 = vpop.f32.mrf.mxu0
  %v472 = vadd.f32 %v423, %v471
  %v473 = vpop.f32.mrf.mxu0
  %474 = vmatprep.mubr.bf16.mxu0 %v152
  %475 = vmatmul.mubr.bf16.gmra.mxu0 %v151
  %v476 = vpop.f32.mrf.mxu0
  %v477 = vadd.f32 %v428, %v476
  %v478 = vpop.f32.mrf.mxu0
  %v479 = vpop.f32.mrf.mxu0
  %v480 = vadd.f32 %v431, %v479
  %v481 = vpop.f32.mrf.mxu0
  %482 = vdwg.mxu0
  %483 = vmatprep.subr.bf16.mxu0 0
  %484 = vmatpush1.bf16.msra.mxu0 0
  %485 = vmatprep.subr.bf16.mxu0 0
  %486 = vmatpush1.bf16.msra.mxu0 0
  %487 = vmatprep.subr.bf16.mxu0 0
  %488 = vmatpush1.bf16.msra.mxu0 0
  %489 = vmatprep.subr.bf16.mxu0 0
  %490 = vmatpush1.bf16.msra.mxu0 0
  %491 = vmatprep.subr.bf16.mxu0 0
  %492 = vmatpush1.bf16.msra.mxu0 %v341
  %493 = vmatprep.subr.bf16.mxu0 0
  %494 = vmatpush1.bf16.msra.mxu0 %v340
  %495 = vmatprep.subr.bf16.mxu0 0
  %496 = vmatpush1.bf16.msra.mxu0 %v339
  %497 = vmatprep.subr.bf16.mxu0 0
  %498 = vmatpush1.bf16.msra.mxu0 %v338
  %499 = vmatprep.subr.bf16.mxu0 0
  %500 = vmatpush2.bf16.msra.mxu0 0
  %501 = vmatprep.subr.bf16.mxu0 0
  %502 = vmatpush2.bf16.msra.mxu0 0
  %503 = vmatprep.subr.bf16.mxu0 0
  %504 = vmatpush2.bf16.msra.mxu0 0
  %505 = vmatprep.subr.bf16.mxu0 0
  %506 = vmatpush2.bf16.msra.mxu0 0
  %507 = vmatprep.subr.bf16.mxu0 0
  %508 = vmatpush2.bf16.msra.mxu0 0
  %509 = vmatprep.subr.bf16.mxu0 0
  %510 = vmatpush2.bf16.msra.mxu0 0
  %511 = vmatprep.subr.bf16.mxu0 0
  %512 = vmatpush2.bf16.msra.mxu0 0
  %513 = vmatprep.subr.bf16.mxu0 0
  %514 = vmatpush2.bf16.msra.mxu0 0
  %515 = vmatprep.mubr.bf16.mxu0 0
  %516 = vmatmul.mubr.bf16.gmra.mxu0 %v380
  %v517 = vpop.f32.mrf.mxu0
  %v518 = vadd.f32 %v469, %v517
  %v519 = vpop.f32.mrf.mxu0
  %v520 = vpop.f32.mrf.mxu0
  %v521 = vadd.f32 %v472, %v520
  %v522 = vpop.f32.mrf.mxu0
  %523 = vmatprep.mubr.bf16.mxu0 0
  %524 = vmatmul.mubr.bf16.gmra.mxu0 %v383
  %v525 = vpop.f32.mrf.mxu0
  %v526 = vadd.f32 %v477, %v525
  %v527 = vpop.f32.mrf.mxu0
  %v528 = vpop.f32.mrf.mxu0
  %v529 = vadd.f32 %v480, %v528
  %v530 = vpop.f32.mrf.mxu0
  %531 = vdwg.mxu0
  %v532 = vmax.f32 %v518, 0.0
  %v533 = vmax.f32 %v521, 0.0
  %v534 = vmax.f32 %v526, 0.0
  %v535 = vmax.f32 %v529, 0.0
  %v536 = vpack.c.bf16 %v533, %v532
  %v537 = vpack.c.bf16 %v535, %v534
  %v538 = vld [vmem:[%s3] sm:$0xff]
  %v539 = vld [vmem:[%s3 + $0x8] sm:$0xff]
  %v540 = vld [vmem:[%s3 + $0x10] sm:$0xff]
  %v541 = vld [vmem:[%s3 + $0x18] sm:$0xff]
  %v542 = vld [vmem:[%s3 + $0x20] sm:$0xff]
  %v543 = vld [vmem:[%s3 + $0x28] sm:$0xff]
  %v544 = vld [vmem:[%s3 + $0x30] sm:$0xff]
  %v545 = vld [vmem:[%s3 + $0x38] sm:$0xff]
  %v546 = vld [vmem:[%s3 + $0x40] sm:$0xff]
  %v547 = vld [vmem:[%s3 + $0x48] sm:$0xff]
  %v548 = vld [vmem:[%s3 + $0x50] sm:$0xff]
  %v549 = vld [vmem:[%s3 + $0x58] sm:$0xff]
  %v550 = vld [vmem:[%s3 + $0x60] sm:$0xff]
  %v551 = vld [vmem:[%s3 + $0x68] sm:$0xff]
  %v552 = vld [vmem:[%s3 + $0x70] sm:$0xff]
  %v553 = vld [vmem:[%s3 + $0x78] sm:$0xff]
  %v554 = vld [vmem:[%s4] sm:$0x3]
  %v556 = vlaneseq
  %v557 = vshrl.u32 %v556, 7
  %v558 = vsub.s32 0, %v557
  %v559 = vrot.slane %v554, %v558
  %v560 = vlaneseq
  %v561 = vshrl.u32 %v560, 7
  %v562 = vsub.s32 1, %v561
  %v563 = vrot.slane %v554, %v562
  %v582 = vunpack.c.l.b16 %v538
  %v583 = vunpack.c.h.b16 %v538
  %v584 = vunpack.c.l.b16 %v539
  %v585 = vunpack.c.h.b16 %v539
  %v586 = vunpack.c.l.b16 %v540
  %v587 = vunpack.c.h.b16 %v540
  %v588 = vunpack.c.l.b16 %v541
  %v589 = vunpack.c.h.b16 %v541
  %v590 = vunpack.c.l.b16 %v542
  %v591 = vunpack.c.h.b16 %v542
  %v592 = vunpack.c.l.b16 %v543
  %v593 = vunpack.c.h.b16 %v543
  %v594 = vunpack.c.l.b16 %v544
  %v595 = vunpack.c.h.b16 %v544
  %v596 = vunpack.c.l.b16 %v545
  %v597 = vunpack.c.h.b16 %v545
  %v598 = vunpack.c.l.b16 %v546
  %v599 = vunpack.c.h.b16 %v546
  %v600 = vunpack.c.l.b16 %v547
  %v601 = vunpack.c.h.b16 %v547
  %v602 = vunpack.c.l.b16 %v548
  %v603 = vunpack.c.h.b16 %v548
  %v604 = vunpack.c.l.b16 %v549
  %v605 = vunpack.c.h.b16 %v549
  %v606 = vunpack.c.l.b16 %v550
  %v607 = vunpack.c.h.b16 %v550
  %v608 = vunpack.c.l.b16 %v551
  %v609 = vunpack.c.h.b16 %v551
  %v610 = vunpack.c.l.b16 %v552
  %v611 = vunpack.c.h.b16 %v552
  %v612 = vunpack.c.l.b16 %v553
  %v613 = vunpack.c.h.b16 %v553
  %v614 = vpack.c.b16 %v584, %v582
  %v615 = vpack.c.b16 %v585, %v583
  %v616 = vpack.c.b16 %v588, %v586
  %v617 = vpack.c.b16 %v589, %v587
  %v618 = vpack.c.b16 %v592, %v590
  %v619 = vpack.c.b16 %v593, %v591
  %v620 = vpack.c.b16 %v596, %v594
  %v621 = vpack.c.b16 %v597, %v595
  %v622 = vpack.c.b16 %v600, %v598
  %v623 = vpack.c.b16 %v601, %v599
  %v624 = vpack.c.b16 %v604, %v602
  %v625 = vpack.c.b16 %v605, %v603
  %v626 = vpack.c.b16 %v608, %v606
  %v627 = vpack.c.b16 %v609, %v607
  %v628 = vpack.c.b16 %v612, %v610
  %v629 = vpack.c.b16 %v613, %v611
  %646 = vmatprep.subr.bf16.mxu0 %v629
  %647 = vmatpush1.bf16.msra.mxu0 %v628
  %648 = vmatprep.subr.bf16.mxu0 %v627
  %649 = vmatpush1.bf16.msra.mxu0 %v626
  %650 = vmatprep.subr.bf16.mxu0 %v625
  %651 = vmatpush1.bf16.msra.mxu0 %v624
  %652 = vmatprep.subr.bf16.mxu0 %v623
  %653 = vmatpush1.bf16.msra.mxu0 %v622
  %654 = vmatprep.subr.bf16.mxu0 %v621
  %655 = vmatpush1.bf16.msra.mxu0 %v620
  %656 = vmatprep.subr.bf16.mxu0 %v619
  %657 = vmatpush1.bf16.msra.mxu0 %v618
  %658 = vmatprep.subr.bf16.mxu0 %v617
  %659 = vmatpush1.bf16.msra.mxu0 %v616
  %660 = vmatprep.subr.bf16.mxu0 %v615
  %661 = vmatpush1.bf16.msra.mxu0 %v614
  %662 = vmatprep.subr.bf16.mxu0 0
  %663 = vmatpush2.bf16.msra.mxu0 0
  %664 = vmatprep.subr.bf16.mxu0 0
  %665 = vmatpush2.bf16.msra.mxu0 0
  %666 = vmatprep.subr.bf16.mxu0 0
  %667 = vmatpush2.bf16.msra.mxu0 0
  %668 = vmatprep.subr.bf16.mxu0 0
  %669 = vmatpush2.bf16.msra.mxu0 0
  %670 = vmatprep.subr.bf16.mxu0 0
  %671 = vmatpush2.bf16.msra.mxu0 0
  %672 = vmatprep.subr.bf16.mxu0 0
  %673 = vmatpush2.bf16.msra.mxu0 0
  %674 = vmatprep.subr.bf16.mxu0 0
  %675 = vmatpush2.bf16.msra.mxu0 0
  %676 = vmatprep.subr.bf16.mxu0 0
  %677 = vmatpush2.bf16.msra.mxu0 0
  %678 = vmatprep.mubr.bf16.mxu0 0
  %679 = vmatmul.mubr.bf16.gmra.mxu0 %v536
  %v680 = vpop.f32.mrf.mxu0
  %v681 = vadd.f32 %v559, %v680
  %v682 = vpop.f32.mrf.mxu0
  %v683 = vadd.f32 %v563, %v682
  %v684 = vpop.f32.mrf.mxu0
  %v685 = vadd.f32 %v559, %v684
  %v686 = vpop.f32.mrf.mxu0
  %v687 = vadd.f32 %v563, %v686
  %688 = vmatprep.mubr.bf16.mxu0 0
  %689 = vmatmul.mubr.bf16.gmra.mxu0 %v537
  %v690 = vpop.f32.mrf.mxu0
  %v691 = vadd.f32 %v559, %v690
  %v692 = vpop.f32.mrf.mxu0
  %v693 = vadd.f32 %v563, %v692
  %v694 = vpop.f32.mrf.mxu0
  %v695 = vadd.f32 %v559, %v694
  %v696 = vpop.f32.mrf.mxu0
  %v697 = vadd.f32 %v563, %v696
  %698 = vdwg.mxu0
  %v699 = vmax.f32 %v681, 0.0
  %v700 = vmax.f32 %v683, 0.0
  %v701 = vmax.f32 %v685, 0.0
  %v702 = vmax.f32 %v687, 0.0
  %v703 = vmax.f32 %v691, 0.0
  %v704 = vmax.f32 %v693, 0.0
  %v705 = vmax.f32 %v695, 0.0
  %v706 = vmax.f32 %v697, 0.0
  %707 = vst [vmem:[%s5] sm:$0xff] %v699
  %708 = vst [vmem:[%s5 + $0x8] sm:$0xff] %v700
  %709 = vst [vmem:[%s5 + $0x10] sm:$0xff] %v701
  %710 = vst [vmem:[%s5 + $0x18] sm:$0xff] %v702
  %711 = vst [vmem:[%s5 + $0x20] sm:$0xff] %v703
  %712 = vst [vmem:[%s5 + $0x28] sm:$0xff] %v704
  %713 = vst [vmem:[%s5 + $0x30] sm:$0xff] %v705
  %714 = vst [vmem:[%s5 + $0x38] sm:$0xff] %v706
  // Predicated region
  $region22: #{quantized_lprnet_forward.1} parent=0 // pred_check
    _
  $region23: #{quantized_lprnet_forward.1} parent=0 // pred_check_branch
    %716 = sbr.rel (0) target = $region25
  $region24: #{quantized_lprnet_forward.1} parent=0 // pred_region
    _
  $region25: #{quantized_lprnet_forward.1} parent=0 // pred_fallthru
    _
  // Predicated region
  $region26: #{quantized_lprnet_forward.1} parent=0 // pred_check
    _
  $region27: #{quantized_lprnet_forward.1} parent=0 // pred_check_branch
    %718 = sbr.rel (0) target = $region29
  $region28: #{quantized_lprnet_forward.1} parent=0 // pred_region
    _
  $region29: #{quantized_lprnet_forward.1} parent=0 // pred_fallthru
    _

</llo_original>
